<compile_context>
chip_gen: v7x
topology: tpu7x:2x2x1
jax: 0.10.0
libtpu: 0.0.40
codegen_flags: <defaults>
</compile_context>

<pallas_src>
import jax
import jax.numpy as jnp
from jax import lax
from jax.experimental import pallas as pl
from jax.experimental.pallas import tpu as pltpu

NUM_UNITS = 32   # cfg.num_units
BATCH = 8
SEQ_LEN = 8      # demo sequence length for the fused-loop path


def lstm_seq_kernel(x_ref, h0_ref, s0_ref, wh_ref, wx_ref, b_ref, out_ref,
                    h_scr, s_scr):
    """One grid step = one CHUNK of timesteps, iterated with an in-kernel loop.

    x_ref  : (Tc, B, H)  time chunk of inputs (VMEM resident)
    h0_ref : (B, H)      initial hidden state
    s0_ref : (B, H)      initial cell state
    wh_ref : (H, 4H)     lane-packed recurrent weights, gate order [i|f|u|o]
    wx_ref : (H, 4H)     lane-packed input weights,    gate order [i|f|u|o]
    b_ref  : (1, 4H)     lane-packed bias row (sublane-broadcast in kernel)
    out_ref: (2, B, H)   packed [h_T; s_T], written on the last chunk only
    h_scr, s_scr : VMEM (B, H) recurrent carries (persist across chunks)
    """
    c = pl.program_id(0)

    @pl.when(c == 0)
    def _init():
        h_scr[...] = h0_ref[...]
        s_scr[...] = s0_ref[...]

    B, H = h_scr.shape
    t_chunk = x_ref.shape[0]

    # Hoisted out of the time loop: resident operands + the gate lane mask.
    wh = wh_ref[...]                              # (H, 4H)
    wx = wx_ref[...]                              # (H, 4H)
    b = b_ref[...]                                # (1, 4H) — sublane bcast on add
    lane = lax.broadcasted_iota(jnp.int32, (B, 4 * H), 1)
    is_u = (lane >= 2 * H) & (lane < 3 * H)       # tanh gate lives in lanes [2H,3H)

    def step(t, carry):
        h, s = carry                              # (B, H), (B, H)
        x = x_ref[t]                              # (B, H)

        # Lane-dense (B, 4H) pre-activation: two K=H MXU dots, one bias add.
        z = (jnp.dot(h, wh, preferred_element_type=jnp.float32)
             + jnp.dot(x, wx, preferred_element_type=jnp.float32)
             + b)

        # Full-vreg EUP passes, blended by lane mask (gate order i, f, u, o).
        act = jnp.where(is_u, jnp.tanh(z), jax.nn.sigmoid(z))   # (B, 4H)

        x_i = act[:, 0 * H:1 * H]
        x_f = act[:, 1 * H:2 * H]
        x_u = act[:, 2 * H:3 * H]
        x_o = act[:, 3 * H:4 * H]

        s_t = x_f * s + x_i * x_u
        h_t = x_o * jnp.tanh(s_t)
        return (h_t, s_t)

    h, s = lax.fori_loop(0, t_chunk, step, (h_scr[...], s_scr[...]),
                         unroll=True)

    h_scr[...] = h
    s_scr[...] = s

    @pl.when(c == pl.num_programs(0) - 1)
    def _finalize():
        out_ref[0] = h.astype(out_ref.dtype)
        out_ref[1] = s.astype(out_ref.dtype)


def lstm_seq_pallas(xs, h0, s0, wh, wx, b, *, t_chunk=None):
    """Run T fused LSTM steps.

    xs: (T, B, H); h0, s0: (B, H); wh, wx: (H, 4H); b: (4H,).
    The grid iterates time chunks of size t_chunk (default: all of T resident,
    i.e. grid=(1,)); the recurrence itself is an in-kernel fori_loop.
    Returns (h_T, s_T), each (B, H).
    """
    T, B, H = xs.shape
    assert wh.shape == (H, 4 * H) and wx.shape == (H, 4 * H) and b.shape == (4 * H,)
    assert h0.shape == (B, H) and s0.shape == (B, H)

    if t_chunk is None:
        t_chunk = T
    assert T % t_chunk == 0
    num_chunks = T // t_chunk

    b_row = b.reshape(1, 4 * H).astype(xs.dtype)

    packed = pl.pallas_call(
        lstm_seq_kernel,
        out_shape=jax.ShapeDtypeStruct((2, B, H), xs.dtype),
        grid_spec=pltpu.PrefetchScalarGridSpec(
            num_scalar_prefetch=0,
            grid=(num_chunks,),
            in_specs=[
                pl.BlockSpec((t_chunk, B, H), lambda c: (c, 0, 0)),   # x chunk
                pl.BlockSpec((B, H), lambda c: (0, 0)),               # h0
                pl.BlockSpec((B, H), lambda c: (0, 0)),               # s0
                pl.BlockSpec((H, 4 * H), lambda c: (0, 0)),           # Wh (resident)
                pl.BlockSpec((H, 4 * H), lambda c: (0, 0)),           # Wx (resident)
                pl.BlockSpec((1, 4 * H), lambda c: (0, 0)),           # bias row
            ],
            out_specs=pl.BlockSpec((2, B, H), lambda c: (0, 0, 0)),   # packed h/s
            scratch_shapes=[
                pltpu.VMEM((B, H), jnp.float32),   # h carry
                pltpu.VMEM((B, H), jnp.float32),   # s carry
            ],
        ),
        compiler_params=pltpu.CompilerParams(
            dimension_semantics=("arbitrary",),    # recurrent (chunk) axis
        ),
    )(xs, h0, s0, wh, wx, b_row)

    return packed[0], packed[1]


def lstm_cell_forward(inputs, states, wh, wx, b):
    """Single-step forward matching the PyTorch module:
    returns (h_t, (h_t, s_t)).  states=None -> zero states expanded to inputs."""
    if states is None:
        h0 = jnp.zeros_like(inputs)
        s0 = jnp.zeros_like(inputs)
    else:
        h0, s0 = states
    h_t, s_t = lstm_seq_pallas(inputs[None], h0, s0, wh, wx, b)
    return h_t, (h_t, s_t)


def init_params(key, in_size=NUM_UNITS, num_units=NUM_UNITS):
    """Mirror four nn.Linear(in_size + num_units, num_units).

    PyTorch Linear: y = xcat @ W_g.T + b_g with W_g (H, 2H), xcat = cat(h, x),
    so rows 0..H-1 of W_g.T multiply h and rows H..2H-1 multiply x.

    Kernel layout (lane-packed, gate order i, f, u, o):
      Wh[:, g*H:(g+1)*H] = W_g.T[:H]   (H, H)
      Wx[:, g*H:(g+1)*H] = W_g.T[H:]   (H, H)
      b [   g*H:(g+1)*H] = b_g

    Returns (wh, wx, b, raw) where raw = (list of W_g, list of b_g) for the
    layout-independent reference.
    """
    assert in_size == num_units, "kernel layout assumes in_size == num_units"
    keys = jax.random.split(key, 8)
    fan_in = in_size + num_units
    bound = 1.0 / jnp.sqrt(fan_in)

    Ws, bs = [], []
    for g in range(4):                       # input, forget, update, output
        W = jax.random.uniform(keys[2 * g], (num_units, fan_in),
                               minval=-bound, maxval=bound, dtype=jnp.float32)
        bias = jax.random.uniform(keys[2 * g + 1], (num_units,),
                                  minval=-bound, maxval=bound, dtype=jnp.float32)
        Ws.append(W)
        bs.append(bias)

    wh = jnp.concatenate([W.T[:num_units] for W in Ws], axis=1)   # (H, 4H)
    wx = jnp.concatenate([W.T[num_units:] for W in Ws], axis=1)   # (H, 4H)
    b = jnp.concatenate(bs, axis=0)                               # (4H,)
    return wh, wx, b, (Ws, bs)


def reference_step(h, s, x, Ws, bs):
    """Layout-independent reference using the raw PyTorch-style per-gate
    Linear weights (W_g: (H, 2H), b_g: (H,)), gate order i, f, u, o."""
    hx = jnp.concatenate([h, x], axis=-1)
    z = [hx @ Ws[g].T + bs[g][None, :] for g in range(4)]
    x_i = jax.nn.sigmoid(z[0])
    x_f = jax.nn.sigmoid(z[1])
    x_u = jnp.tanh(z[2])
    x_o = jax.nn.sigmoid(z[3])
    s_t = x_f * s + x_i * x_u
    h_t = x_o * jnp.tanh(s_t)
    return h_t, s_t


if __name__ == "__main__":
    key = jax.random.PRNGKey(0)
    k_param, k_x, k_seq = jax.random.split(key, 3)

    wh, wx, b, (Ws, bs) = init_params(k_param)

    # --- single-step call, states=None (module semantics) ---------------
    inputs = jax.random.normal(k_x, (BATCH, NUM_UNITS), dtype=jnp.float32)
    h_t, (h_same, s_t) = lstm_cell_forward(inputs, None, wh, wx, b)
    jax.block_until_ready((h_t, h_same, s_t))

    h_ref, s_ref = reference_step(jnp.zeros_like(inputs),
                                  jnp.zeros_like(inputs), inputs, Ws, bs)
    assert jnp.allclose(h_t, h_ref, atol=1e-5, rtol=1e-5)
    assert jnp.allclose(s_t, s_ref, atol=1e-5, rtol=1e-5)
    assert jnp.allclose(h_t, h_same)

    # --- fused multi-step sequence (recurrence inside one pallas_call) ---
    xs = jax.random.normal(k_seq, (SEQ_LEN, BATCH, NUM_UNITS), dtype=jnp.float32)
    h0 = jnp.zeros((BATCH, NUM_UNITS), dtype=jnp.float32)
    s0 = jnp.zeros((BATCH, NUM_UNITS), dtype=jnp.float32)

    hT, sT = lstm_seq_pallas(xs, h0, s0, wh, wx, b)
    jax.block_until_ready((hT, sT))

    h_r, s_r = h0, s0
    for t in range(SEQ_LEN):
        h_r, s_r = reference_step(h_r, s_r, xs[t], Ws, bs)
    assert jnp.allclose(hT, h_r, atol=1e-5, rtol=1e-5)
    assert jnp.allclose(sT, s_r, atol=1e-5, rtol=1e-5)

    # --- chunked-time path (same kernel, grid over chunks) ---------------
    hT2, sT2 = lstm_seq_pallas(xs, h0, s0, wh, wx, b, t_chunk=SEQ_LEN // 2)
    jax.block_until_ready((hT2, sT2))
    assert jnp.allclose(hT2, h_r, atol=1e-5, rtol=1e-5)
    assert jnp.allclose(sT2, s_r, atol=1e-5, rtol=1e-5)

    print("KERNEL_OK")
</pallas_src>

<mosaic_0001>
module attributes {stable_mosaic.version = 11 : i64} {
  func.func @lstm_seq_kernel(%arg0: i32, %arg1: memref<1x8x32xf32, #tpu.memory_space<vmem>>, %arg2: memref<8x32xf32, #tpu.memory_space<vmem>>, %arg3: memref<8x32xf32, #tpu.memory_space<vmem>>, %arg4: memref<32x128xf32, #tpu.memory_space<vmem>>, %arg5: memref<32x128xf32, #tpu.memory_space<vmem>>, %arg6: memref<1x128xf32, #tpu.memory_space<vmem>>, %arg7: memref<2x8x32xf32, #tpu.memory_space<vmem>>, %arg8: memref<8x32xf32, #tpu.memory_space<vmem>>, %arg9: memref<8x32xf32, #tpu.memory_space<vmem>>) attributes {dimension_semantics = [#tpu.dimension_semantics<arbitrary>], iteration_bounds = array<i64: 1>, scalar_prefetch = 0 : i64, scratch_operands = 2 : i64, tpu.core_type = #tpu.core_type<tc>, window_params = [{transform_indices = @transform_0, window_bounds = array<i64: 1, 8, 32>}, {pipeline_mode = #tpu.pipeline_mode<synchronous>, transform_indices = @transform_1, window_bounds = array<i64: 8, 32>}, {pipeline_mode = #tpu.pipeline_mode<synchronous>, transform_indices = @transform_2, window_bounds = array<i64: 8, 32>}, {pipeline_mode = #tpu.pipeline_mode<synchronous>, transform_indices = @transform_3, window_bounds = array<i64: 32, 128>}, {pipeline_mode = #tpu.pipeline_mode<synchronous>, transform_indices = @transform_4, window_bounds = array<i64: 32, 128>}, {pipeline_mode = #tpu.pipeline_mode<synchronous>, transform_indices = @transform_5, window_bounds = array<i64: 1, 128>}, {pipeline_mode = #tpu.pipeline_mode<synchronous>, transform_indices = @transform_6, window_bounds = array<i64: 2, 8, 32>}]} {
    %c0_i32 = arith.constant 0 : i32
    %0 = arith.cmpi eq, %arg0, %c0_i32 : i32
    %1 = arith.extui %0 : i1 to i32
    %c0_i32_0 = arith.constant 0 : i32
    %2 = arith.cmpi ne, %1, %c0_i32_0 : i32
    scf.if %2 {
      %c0_21 = arith.constant 0 : index
      %c0_22 = arith.constant 0 : index
      %43 = vector.load %arg2[%c0_21, %c0_22] : memref<8x32xf32, #tpu.memory_space<vmem>>, vector<8x32xf32>
      %c0_23 = arith.constant 0 : index
      %c0_24 = arith.constant 0 : index
      %44 = vector.load %arg8[%c0_23, %c0_24] : memref<8x32xf32, #tpu.memory_space<vmem>>, vector<8x32xf32>
      tpu.vector_store %arg8[%c0_23, %c0_24], %43 {strides = array<i32>} : memref<8x32xf32, #tpu.memory_space<vmem>>, vector<8x32xf32>,
      %c0_25 = arith.constant 0 : index
      %c0_26 = arith.constant 0 : index
      %45 = vector.load %arg3[%c0_25, %c0_26] : memref<8x32xf32, #tpu.memory_space<vmem>>, vector<8x32xf32>
      %c0_27 = arith.constant 0 : index
      %c0_28 = arith.constant 0 : index
      %46 = vector.load %arg9[%c0_27, %c0_28] : memref<8x32xf32, #tpu.memory_space<vmem>>, vector<8x32xf32>
      tpu.vector_store %arg9[%c0_27, %c0_28], %45 {strides = array<i32>} : memref<8x32xf32, #tpu.memory_space<vmem>>, vector<8x32xf32>,
    } else {
    }
    %c0 = arith.constant 0 : index
    %c0_1 = arith.constant 0 : index
    %3 = vector.load %arg4[%c0, %c0_1] : memref<32x128xf32, #tpu.memory_space<vmem>>, vector<32x128xf32>
    %c0_2 = arith.constant 0 : index
    %c0_3 = arith.constant 0 : index
    %4 = vector.load %arg5[%c0_2, %c0_3] : memref<32x128xf32, #tpu.memory_space<vmem>>, vector<32x128xf32>
    %c0_4 = arith.constant 0 : index
    %c0_5 = arith.constant 0 : index
    %5 = vector.load %arg6[%c0_4, %c0_5] : memref<1x128xf32, #tpu.memory_space<vmem>>, vector<1x128xf32>
    %6 = tpu.iota {dimensions = array<i32: 1>} : vector<8x128xi32>
    %c64_i32 = arith.constant 64 : i32
    %7 = vector.broadcast %c64_i32 : i32 to vector<8x128xi32>
    %8 = arith.cmpi sge, %6, %7 : vector<8x128xi32>
    %c96_i32 = arith.constant 96 : i32
    %9 = vector.broadcast %c96_i32 : i32 to vector<8x128xi32>
    %10 = arith.cmpi slt, %6, %9 : vector<8x128xi32>
    %11 = arith.andi %8, %10 : vector<8x128xi1>
    %c0_6 = arith.constant 0 : index
    %c0_7 = arith.constant 0 : index
    %12 = vector.load %arg8[%c0_6, %c0_7] : memref<8x32xf32, #tpu.memory_space<vmem>>, vector<8x32xf32>
    %c0_8 = arith.constant 0 : index
    %c0_9 = arith.constant 0 : index
    %13 = vector.load %arg9[%c0_8, %c0_9] : memref<8x32xf32, #tpu.memory_space<vmem>>, vector<8x32xf32>
    %c0_i32_10 = arith.constant 0 : i32
    %14 = arith.index_cast %c0_i32_10 : i32 to index
    %c0_11 = arith.constant 0 : index
    %c0_12 = arith.constant 0 : index
    %15 = vector.load %arg1[%14, %c0_11, %c0_12] : memref<1x8x32xf32, #tpu.memory_space<vmem>>, vector<1x8x32xf32>
    %16 = vector.shape_cast %15 : vector<1x8x32xf32> to vector<8x32xf32>
    %cst = arith.constant dense<0.000000e+00> : vector<8x128xf32>
    %17 = tpu.matmul %12, %3, %cst {dimension_numbers = #tpu.dot_dimension_numbers<[1], [0], [0], [1], [0, 0, 1, 1], [], []>} : vector<8x32xf32>, vector<32x128xf32>, vector<8x128xf32> -> vector<8x128xf32>
    %cst_13 = arith.constant dense<0.000000e+00> : vector<8x128xf32>
    %18 = tpu.matmul %16, %4, %cst_13 {dimension_numbers = #tpu.dot_dimension_numbers<[1], [0], [0], [1], [0, 0, 1, 1], [], []>} : vector<8x32xf32>, vector<32x128xf32>, vector<8x128xf32> -> vector<8x128xf32>
    %19 = arith.addf %17, %18 : vector<8x128xf32>
    %20 = vector.broadcast %5 : vector<1x128xf32> to vector<8x128xf32>
    %21 = arith.addf %19, %20 : vector<8x128xf32>
    %22 = math.tanh %21 : vector<8x128xf32>
    %23 = arith.negf %21 : vector<8x128xf32>
    %24 = math.exp %23 : vector<8x128xf32>
    %cst_14 = arith.constant 1.000000e+00 : f32
    %25 = vector.broadcast %cst_14 : f32 to vector<8x128xf32>
    %26 = arith.addf %25, %24 : vector<8x128xf32>
    %27 = arith.divf %25, %26 : vector<8x128xf32>
    %28 = arith.select %11, %22, %27 : vector<8x128xi1>, vector<8x128xf32>
    %29 = vector.extract_strided_slice %28 {offsets = [0, 0], sizes = [8, 32], strides = [1, 1]} : vector<8x128xf32> to vector<8x32xf32>
    %30 = vector.extract_strided_slice %28 {offsets = [0, 32], sizes = [8, 32], strides = [1, 1]} : vector<8x128xf32> to vector<8x32xf32>
    %31 = vector.extract_strided_slice %28 {offsets = [0, 64], sizes = [8, 32], strides = [1, 1]} : vector<8x128xf32> to vector<8x32xf32>
    %32 = vector.extract_strided_slice %28 {offsets = [0, 96], sizes = [8, 32], strides = [1, 1]} : vector<8x128xf32> to vector<8x32xf32>
    %33 = arith.mulf %30, %13 : vector<8x32xf32>
    %34 = arith.mulf %29, %31 : vector<8x32xf32>
    %35 = arith.addf %33, %34 : vector<8x32xf32>
    %36 = math.tanh %35 : vector<8x32xf32>
    %37 = arith.mulf %32, %36 : vector<8x32xf32>
    %c1_i32 = arith.constant 1 : i32
    %c0_15 = arith.constant 0 : index
    %c0_16 = arith.constant 0 : index
    %38 = vector.load %arg8[%c0_15, %c0_16] : memref<8x32xf32, #tpu.memory_space<vmem>>, vector<8x32xf32>
    tpu.vector_store %arg8[%c0_15, %c0_16], %37 {strides = array<i32>} : memref<8x32xf32, #tpu.memory_space<vmem>>, vector<8x32xf32>,
    %c0_17 = arith.constant 0 : index
    %c0_18 = arith.constant 0 : index
    %39 = vector.load %arg9[%c0_17, %c0_18] : memref<8x32xf32, #tpu.memory_space<vmem>>, vector<8x32xf32>
    tpu.vector_store %arg9[%c0_17, %c0_18], %35 {strides = array<i32>} : memref<8x32xf32, #tpu.memory_space<vmem>>, vector<8x32xf32>,
    %c0_i32_19 = arith.constant 0 : i32
    %40 = arith.cmpi eq, %arg0, %c0_i32_19 : i32
    %41 = arith.extui %40 : i1 to i32
    %c0_i32_20 = arith.constant 0 : i32
    %42 = arith.cmpi ne, %41, %c0_i32_20 : i32
    scf.if %42 {
      %c0_21 = arith.constant 0 : index
      %c0_22 = arith.constant 0 : index
      %c0_23 = arith.constant 0 : index
      %43 = vector.load %arg7[%c0_21, %c0_22, %c0_23] : memref<2x8x32xf32, #tpu.memory_space<vmem>>, vector<1x8x32xf32>
      %44 = vector.shape_cast %43 : vector<1x8x32xf32> to vector<8x32xf32>
      %45 = vector.shape_cast %37 : vector<8x32xf32> to vector<1x8x32xf32>
      tpu.vector_store %arg7[%c0_21, %c0_22, %c0_23], %45 {strides = array<i32>} : memref<2x8x32xf32, #tpu.memory_space<vmem>>, vector<1x8x32xf32>,
      %c1 = arith.constant 1 : index
      %c0_24 = arith.constant 0 : index
      %c0_25 = arith.constant 0 : index
      %46 = vector.load %arg7[%c1, %c0_24, %c0_25] : memref<2x8x32xf32, #tpu.memory_space<vmem>>, vector<1x8x32xf32>
      %47 = vector.shape_cast %46 : vector<1x8x32xf32> to vector<8x32xf32>
      %48 = vector.shape_cast %35 : vector<8x32xf32> to vector<1x8x32xf32>
      tpu.vector_store %arg7[%c1, %c0_24, %c0_25], %48 {strides = array<i32>} : memref<2x8x32xf32, #tpu.memory_space<vmem>>, vector<1x8x32xf32>,
    } else {
    }
    return
  }
  func.func @transform_0(%arg0: i32) -> (i32, i32, i32) {
    %c0_i32 = arith.constant 0 : i32
    %c0_i32_0 = arith.constant 0 : i32
    %c0_i32_1 = arith.constant 0 : i32
    return %arg0, %c0_i32, %c0_i32_0 : i32, i32, i32
  }
  func.func @transform_1(%arg0: i32) -> (i32, i32) {
    %c0_i32 = arith.constant 0 : i32
    %c0_i32_0 = arith.constant 0 : i32
    %c0_i32_1 = arith.constant 0 : i32
    return %c0_i32, %c0_i32_0 : i32, i32
  }
  func.func @transform_2(%arg0: i32) -> (i32, i32) {
    %c0_i32 = arith.constant 0 : i32
    %c0_i32_0 = arith.constant 0 : i32
    %c0_i32_1 = arith.constant 0 : i32
    return %c0_i32, %c0_i32_0 : i32, i32
  }
  func.func @transform_3(%arg0: i32) -> (i32, i32) {
    %c0_i32 = arith.constant 0 : i32
    %c0_i32_0 = arith.constant 0 : i32
    %c0_i32_1 = arith.constant 0 : i32
    return %c0_i32, %c0_i32_0 : i32, i32
  }
  func.func @transform_4(%arg0: i32) -> (i32, i32) {
    %c0_i32 = arith.constant 0 : i32
    %c0_i32_0 = arith.constant 0 : i32
    %c0_i32_1 = arith.constant 0 : i32
    return %c0_i32, %c0_i32_0 : i32, i32
  }
  func.func @transform_5(%arg0: i32) -> (i32, i32) {
    %c0_i32 = arith.constant 0 : i32
    %c0_i32_0 = arith.constant 0 : i32
    %c0_i32_1 = arith.constant 0 : i32
    return %c0_i32, %c0_i32_0 : i32, i32
  }
  func.func @transform_6(%arg0: i32) -> (i32, i32, i32) {
    %c0_i32 = arith.constant 0 : i32
    %c0_i32_0 = arith.constant 0 : i32
    %c0_i32_1 = arith.constant 0 : i32
    %c0_i32_2 = arith.constant 0 : i32
    return %c0_i32, %c0_i32_0, %c0_i32_1 : i32, i32, i32
  }
}

</mosaic_0001>

<llo_original>
// kernel: tpu_custom_call.1
$region0: #{tpu_custom_call.1}
  #allocation0 [shape = 'u32[]', space=smem, size = 0x4, offset = 0x4, fixed_abs, tag = 'smem constant byte address 0x4 - core index']
  #allocation1 [shape = 'u32[144,128]{1,0:T(1,128)}', space=vmem, size = 0x12000, scoped, tag = 'internal scratch']
  #allocation2 [shape = 'f32[8,32]{1,0:T(8,128)}', space=vmem, size = 0x1000, scoped, tag = 'scratch operand']
  #allocation3 [shape = 'f32[8,32]{1,0:T(8,128)}', space=vmem, size = 0x1000, scoped, tag = 'scratch operand']
  %s0 = inlined_call_operand.hbm [shape: f32[1,8,32], index: 0, kind: input, shape index: {}]
  %s1 = inlined_call_operand.hbm [shape: f32[8,32], index: 1, kind: input, shape index: {}]
  %s2 = inlined_call_operand.hbm [shape: f32[8,32], index: 2, kind: input, shape index: {}]
  %s3 = inlined_call_operand.hbm [shape: f32[32,128], index: 3, kind: input, shape index: {}]
  %s4 = inlined_call_operand.hbm [shape: f32[32,128], index: 4, kind: input, shape index: {}]
  %s5 = inlined_call_operand.vmem [shape: f32[1,128], index: 5, kind: input, shape index: {}]
  %s6 = inlined_call_operand.hbm [shape: f32[2,8,32], index: 6, kind: output, shape index: {}]
  %s7 = sld [smem:[#allocation0]]
  $region62: #{tpu_custom_call.1} parent=0
    _
  %s9 = ssub.s32 1, %s7
  %s10 = scalar_select 0, %s9, %s7
  $region1: #{tpu_custom_call.1} parent=0
    #allocation4 [shape = 'u8[4096]{0}', space=vmem, size = 0x1000, scoped, tag = 'input window, operand 0, single buffered']
    #allocation5 [shape = 's32[1]{0}', space=sflag, size = 0x4, scoped, tag = 'scoped memory for tpu_custom_call.1']
    #allocation6 [shape = 's32[1]{0}', space=sflag, size = 0x4, scoped, tag = 'scoped memory for tpu_custom_call.1']
    #allocation7 [shape = 'u8[4096]{0}', space=vmem, size = 0x1000, scoped, tag = 'input window, operand 1, single buffered']
    #allocation8 [shape = 's32[1]{0}', space=sflag, size = 0x4, scoped, tag = 'scoped memory for tpu_custom_call.1']
    #allocation9 [shape = 'u8[4096]{0}', space=vmem, size = 0x1000, scoped, tag = 'input window, operand 2, single buffered']
    #allocation10 [shape = 'u8[16384]{0}', space=vmem, size = 0x4000, scoped, tag = 'input window, operand 3, single buffered']
    #allocation11 [shape = 's32[1]{0}', space=sflag, size = 0x4, scoped, tag = 'scoped memory for tpu_custom_call.1']
    #allocation12 [shape = 'u8[16384]{0}', space=vmem, size = 0x4000, scoped, tag = 'input window, operand 4, single buffered']
    #allocation13 [shape = 'u8[8192]{0}', space=vmem, size = 0x2000, scoped, tag = 'output window, operand 0, single buffered']
    %11 = vsyncpa [#allocation5], 0
    %12 = vsyncpa [#allocation8], 0
    %13 = vsyncpa [#allocation11], 0
    %14 = vsyncpa [#allocation6], 0
    // Predicated region
    $region2: #{tpu_custom_call.1} parent=1 // pred_check
      _
    $region3: #{tpu_custom_call.1} parent=1 // pred_check_branch
      %16 = sbr.rel (0) target = $region5
    $region4: #{tpu_custom_call.1} parent=1 // pred_region
      %s18 = ssub.s32 128, 128
      %19 = vsyncadd [#allocation5], %s18
      %s21 = sshll.u32 [#allocation4], 4
      %s22 = int_to_ptr.vmem [resolvable:$true] %s21
      %24 = dma.hbm_to_vmem [thread:$0]  %s0, 128, %s22, [#allocation5]
    $region5: #{tpu_custom_call.1} parent=1 // pred_fallthru
      _
    // Predicated region
    $region6: #{tpu_custom_call.1} parent=1 // pred_check
      _
    $region7: #{tpu_custom_call.1} parent=1 // pred_check_branch
      %26 = sbr.rel (0) target = $region9
    $region8: #{tpu_custom_call.1} parent=1 // pred_region
      %s28 = ssub.s32 128, 128
      %29 = vsyncadd [#allocation8], %s28
      %s31 = sshll.u32 [#allocation7], 4
      %s32 = int_to_ptr.vmem [resolvable:$true] %s31
      %34 = dma.hbm_to_vmem [thread:$0]  %s1, 128, %s32, [#allocation8]
    $region9: #{tpu_custom_call.1} parent=1 // pred_fallthru
      _
    // Predicated region
    $region10: #{tpu_custom_call.1} parent=1 // pred_check
      _
    $region11: #{tpu_custom_call.1} parent=1 // pred_check_branch
      %36 = sbr.rel (0) target = $region13
    $region12: #{tpu_custom_call.1} parent=1 // pred_region
      %s38 = ssub.s32 128, 128
      %39 = vsyncadd [#allocation8], %s38
      %s41 = sshll.u32 [#allocation9], 4
      %s42 = int_to_ptr.vmem [resolvable:$true] %s41
      %44 = dma.hbm_to_vmem [thread:$0]  %s2, 128, %s42, [#allocation8]
    $region13: #{tpu_custom_call.1} parent=1 // pred_fallthru
      _
    // Predicated region
    $region14: #{tpu_custom_call.1} parent=1 // pred_check
      _
    $region15: #{tpu_custom_call.1} parent=1 // pred_check_branch
      %46 = sbr.rel (0) target = $region17
    $region16: #{tpu_custom_call.1} parent=1 // pred_region
      %s48 = ssub.s32 512, 512
      %49 = vsyncadd [#allocation11], %s48
      %s50 = sshll.u32 [#allocation10], 4
      %s51 = int_to_ptr.vmem [resolvable:$true] %s50
      %56 = dma.hbm_to_vmem [thread:$0]  %s3, 512, %s51, [#allocation11], 128, 128, 8
    $region17: #{tpu_custom_call.1} parent=1 // pred_fallthru
      _
    // Predicated region
    $region18: #{tpu_custom_call.1} parent=1 // pred_check
      _
    $region19: #{tpu_custom_call.1} parent=1 // pred_check_branch
      %58 = sbr.rel (0) target = $region21
    $region20: #{tpu_custom_call.1} parent=1 // pred_region
      %s60 = ssub.s32 512, 512
      %61 = vsyncadd [#allocation11], %s60
      %s62 = sshll.u32 [#allocation12], 4
      %s63 = int_to_ptr.vmem [resolvable:$true] %s62
      %68 = dma.hbm_to_vmem [thread:$0]  %s4, 512, %s63, [#allocation11], 128, 128, 8
    $region21: #{tpu_custom_call.1} parent=1 // pred_fallthru
      _
    // Predicated region
    $region22: #{tpu_custom_call.1} parent=1 // pred_check
      _
    $region23: #{tpu_custom_call.1} parent=1 // pred_check_branch
      %70 = sbr.rel (0) target = $region25
    $region24: #{tpu_custom_call.1} parent=1 // pred_region
      _
    $region25: #{tpu_custom_call.1} parent=1 // pred_fallthru
      _
    // Predicated region
    $region26: #{tpu_custom_call.1} parent=1 // pred_check
      _
    $region27: #{tpu_custom_call.1} parent=1 // pred_check_branch
      %72 = sbr.rel (0) target = $region29
    $region28: #{tpu_custom_call.1} parent=1 // pred_region
      %73 = dma.done [#allocation5], 128
    $region29: #{tpu_custom_call.1} parent=1 // pred_fallthru
      _
    // Predicated region
    $region30: #{tpu_custom_call.1} parent=1 // pred_check
      _
    $region31: #{tpu_custom_call.1} parent=1 // pred_check_branch
      %75 = sbr.rel (0) target = $region33
    $region32: #{tpu_custom_call.1} parent=1 // pred_region
      %76 = dma.done [#allocation8], 128
    $region33: #{tpu_custom_call.1} parent=1 // pred_fallthru
      _
    // Predicated region
    $region34: #{tpu_custom_call.1} parent=1 // pred_check
      _
    $region35: #{tpu_custom_call.1} parent=1 // pred_check_branch
      %78 = sbr.rel (0) target = $region37
    $region36: #{tpu_custom_call.1} parent=1 // pred_region
      %79 = dma.done [#allocation8], 128
    $region37: #{tpu_custom_call.1} parent=1 // pred_fallthru
      _
    // Predicated region
    $region38: #{tpu_custom_call.1} parent=1 // pred_check
      _
    $region39: #{tpu_custom_call.1} parent=1 // pred_check_branch
      %81 = sbr.rel (0) target = $region41
    $region40: #{tpu_custom_call.1} parent=1 // pred_region
      %82 = dma.done [#allocation11], 512
    $region41: #{tpu_custom_call.1} parent=1 // pred_fallthru
      _
    // Predicated region
    $region42: #{tpu_custom_call.1} parent=1 // pred_check
      _
    $region43: #{tpu_custom_call.1} parent=1 // pred_check_branch
      %84 = sbr.rel (0) target = $region45
    $region44: #{tpu_custom_call.1} parent=1 // pred_region
      %85 = dma.done [#allocation11], 512
    $region45: #{tpu_custom_call.1} parent=1 // pred_fallthru
      _
    %p86 = scmp.eq.s32.totalorder 0, 0
    // Predicated region
    $region46: #{tpu_custom_call.1} parent=1 // pred_check
      %p87 = pneg %p86
    $region47: #{tpu_custom_call.1} parent=1 // pred_check_branch
      %89 = sbr.rel (%p87) target = $region49
    $region48: #{tpu_custom_call.1} parent=1 // pred_region
      %v90 = vld [vmem:[#allocation7] sm:$0xff]
      %vm91 = vcmask 261120
      %92 = vst.msk [vmem:[#allocation2] sm:$0xff] %vm91, %v90
      %v93 = vld [vmem:[#allocation9] sm:$0xff]
      %94 = vst.msk [vmem:[#allocation3] sm:$0xff] %vm91, %v93
    $region49: #{tpu_custom_call.1} parent=1 // pred_fallthru
      _
    %v95 = vld [vmem:[#allocation10] sm:$0xff]
    %v96 = vld [vmem:[#allocation10 + $0x8] sm:$0xff]
    %v97 = vld [vmem:[#allocation10 + $0x10] sm:$0xff]
    %v98 = vld [vmem:[#allocation10 + $0x18] sm:$0xff]
    %v99 = vld [vmem:[#allocation12] sm:$0xff]
    %v100 = vld [vmem:[#allocation12 + $0x8] sm:$0xff]
    %v101 = vld [vmem:[#allocation12 + $0x10] sm:$0xff]
    %v102 = vld [vmem:[#allocation12 + $0x18] sm:$0xff]
    %v103 = vld [vmem:[%s5] sm:$0x1]
    %v104 = vlaneseq
    %v105 = vand.u32 %v104, 127
    %vm106 = vcmp.ge.s32.totalorder %v105, 64
    %vm107 = vcmp.lt.s32.totalorder %v105, 96
    %vm108 = vmand %vm106, %vm107
    %v109 = vld [vmem:[#allocation2] sm:$0xff]
    %v110 = vld [vmem:[#allocation3] sm:$0xff]
    %v111 = vld [vmem:[#allocation4] sm:$0xff]
    %vm112 = vcmask 261120
    %v114 = vsel %vm112, %v111, 0
    %116 = vmatprep.subr.mxu0 0.0
    %117 = vmatpush1.msra.mxu0 %v99
    %118 = vmatprep.subr.mxu0 0.0
    %119 = vmatpush1.msra.mxu0 %v100
    %120 = vmatprep.subr.mxu0 0.0
    %121 = vmatpush1.msra.mxu0 %v101
    %122 = vmatprep.subr.mxu0 0.0
    %123 = vmatpush1.msra.mxu0 %v102
    %124 = vmatprep.subr.mxu0 0.0
    %125 = vmatpush1.msra.mxu0 0.0
    %126 = vmatprep.subr.mxu0 0.0
    %127 = vmatpush1.msra.mxu0 0.0
    %128 = vmatprep.subr.mxu0 0.0
    %129 = vmatpush1.msra.mxu0 0.0
    %130 = vmatprep.subr.mxu0 0.0
    %131 = vmatpush1.msra.mxu0 0.0
    %132 = vmatprep.subr.mxu0 0.0
    %133 = vmatpush1.msra.mxu0 0.0
    %134 = vmatprep.subr.mxu0 0.0
    %135 = vmatpush1.msra.mxu0 0.0
    %136 = vmatprep.subr.mxu0 0.0
    %137 = vmatpush1.msra.mxu0 0.0
    %138 = vmatprep.subr.mxu0 0.0
    %139 = vmatpush1.msra.mxu0 0.0
    %140 = vmatprep.subr.mxu0 0.0
    %141 = vmatpush1.msra.mxu0 0.0
    %142 = vmatprep.subr.mxu0 0.0
    %143 = vmatpush1.msra.mxu0 0.0
    %144 = vmatprep.subr.mxu0 0.0
    %145 = vmatpush1.msra.mxu0 0.0
    %146 = vmatprep.subr.mxu0 0.0
    %147 = vmatpush1.msra.mxu0 0.0
    %148 = vmatprep.subr.mxu0 0.0
    %149 = vmatpush1.msra.mxu0 0.0
    %150 = vmatprep.subr.mxu0 0.0
    %151 = vmatpush1.msra.mxu0 0.0
    %152 = vmatprep.subr.mxu0 0.0
    %153 = vmatpush1.msra.mxu0 0.0
    %154 = vmatprep.subr.mxu0 0.0
    %155 = vmatpush1.msra.mxu0 0.0
    %156 = vmatprep.subr.mxu0 0.0
    %157 = vmatpush1.msra.mxu0 0.0
    %158 = vmatprep.subr.mxu0 0.0
    %159 = vmatpush1.msra.mxu0 0.0
    %160 = vmatprep.subr.mxu0 0.0
    %161 = vmatpush1.msra.mxu0 0.0
    %162 = vmatprep.subr.mxu0 0.0
    %163 = vmatpush1.msra.mxu0 0.0
    %164 = vmatprep.subr.mxu0 0.0
    %165 = vmatpush1.msra.mxu0 0.0
    %166 = vmatprep.subr.mxu0 0.0
    %167 = vmatpush1.msra.mxu0 0.0
    %168 = vmatprep.subr.mxu0 0.0
    %169 = vmatpush1.msra.mxu0 0.0
    %170 = vmatprep.subr.mxu0 0.0
    %171 = vmatpush1.msra.mxu0 0.0
    %172 = vmatprep.subr.mxu0 0.0
    %173 = vmatpush1.msra.mxu0 0.0
    %174 = vmatprep.subr.mxu0 0.0
    %175 = vmatpush1.msra.mxu0 0.0
    %176 = vmatprep.subr.mxu0 0.0
    %177 = vmatpush1.msra.mxu0 0.0
    %178 = vmatprep.subr.mxu0 0.0
    %179 = vmatpush1.msra.mxu0 0.0
    %180 = vmatprep.mubr.f32.mxu0 0.0
    %181 = vmatmul.mubr.f32.gmra.mrb[0].mxu0 %v114
    %v182 = vpop.f32.mrb[0].mxu0
    %v183 = vadd.f32 0.0, %v182
    %v184 = vpop.f32.mrb[0].mxu0
    %185 = vdwg.mxu0
    %v187 = vsel %vm112, %v109, 0
    %189 = vmatprep.subr.mxu0 0.0
    %190 = vmatpush1.msra.mxu0 %v95
    %191 = vmatprep.subr.mxu0 0.0
    %192 = vmatpush1.msra.mxu0 %v96
    %193 = vmatprep.subr.mxu0 0.0
    %194 = vmatpush1.msra.mxu0 %v97
    %195 = vmatprep.subr.mxu0 0.0
    %196 = vmatpush1.msra.mxu0 %v98
    %197 = vmatprep.subr.mxu0 0.0
    %198 = vmatpush1.msra.mxu0 0.0
    %199 = vmatprep.subr.mxu0 0.0
    %200 = vmatpush1.msra.mxu0 0.0
    %201 = vmatprep.subr.mxu0 0.0
    %202 = vmatpush1.msra.mxu0 0.0
    %203 = vmatprep.subr.mxu0 0.0
    %204 = vmatpush1.msra.mxu0 0.0
    %205 = vmatprep.subr.mxu0 0.0
    %206 = vmatpush1.msra.mxu0 0.0
    %207 = vmatprep.subr.mxu0 0.0
    %208 = vmatpush1.msra.mxu0 0.0
    %209 = vmatprep.subr.mxu0 0.0
    %210 = vmatpush1.msra.mxu0 0.0
    %211 = vmatprep.subr.mxu0 0.0
    %212 = vmatpush1.msra.mxu0 0.0
    %213 = vmatprep.subr.mxu0 0.0
    %214 = vmatpush1.msra.mxu0 0.0
    %215 = vmatprep.subr.mxu0 0.0
    %216 = vmatpush1.msra.mxu0 0.0
    %217 = vmatprep.subr.mxu0 0.0
    %218 = vmatpush1.msra.mxu0 0.0
    %219 = vmatprep.subr.mxu0 0.0
    %220 = vmatpush1.msra.mxu0 0.0
    %221 = vmatprep.subr.mxu0 0.0
    %222 = vmatpush1.msra.mxu0 0.0
    %223 = vmatprep.subr.mxu0 0.0
    %224 = vmatpush1.msra.mxu0 0.0
    %225 = vmatprep.subr.mxu0 0.0
    %226 = vmatpush1.msra.mxu0 0.0
    %227 = vmatprep.subr.mxu0 0.0
    %228 = vmatpush1.msra.mxu0 0.0
    %229 = vmatprep.subr.mxu0 0.0
    %230 = vmatpush1.msra.mxu0 0.0
    %231 = vmatprep.subr.mxu0 0.0
    %232 = vmatpush1.msra.mxu0 0.0
    %233 = vmatprep.subr.mxu0 0.0
    %234 = vmatpush1.msra.mxu0 0.0
    %235 = vmatprep.subr.mxu0 0.0
    %236 = vmatpush1.msra.mxu0 0.0
    %237 = vmatprep.subr.mxu0 0.0
    %238 = vmatpush1.msra.mxu0 0.0
    %239 = vmatprep.subr.mxu0 0.0
    %240 = vmatpush1.msra.mxu0 0.0
    %241 = vmatprep.subr.mxu0 0.0
    %242 = vmatpush1.msra.mxu0 0.0
    %243 = vmatprep.subr.mxu0 0.0
    %244 = vmatpush1.msra.mxu0 0.0
    %245 = vmatprep.subr.mxu0 0.0
    %246 = vmatpush1.msra.mxu0 0.0
    %247 = vmatprep.subr.mxu0 0.0
    %248 = vmatpush1.msra.mxu0 0.0
    %249 = vmatprep.subr.mxu0 0.0
    %250 = vmatpush1.msra.mxu0 0.0
    %251 = vmatprep.subr.mxu0 0.0
    %252 = vmatpush1.msra.mxu0 0.0
    %253 = vmatprep.mubr.f32.mxu0 0.0
    %254 = vmatmul.mubr.f32.gmra.mrb[0].mxu0 %v187
    %v255 = vpop.f32.mrb[0].mxu0
    %v256 = vadd.f32 %v183, %v255
    %v257 = vpop.f32.mrb[0].mxu0
    %258 = vdwg.mxu0
    %v260 = vlaneseq
    %v261 = vshrl.u32 %v260, 7
    %v262 = vsub.s32 0, %v261
    %v263 = vrot.slane %v103, %v262
    %v265 = vadd.f32 %v256, %v263
    %v266 = vtanh.pop %v265
    %v267 = vxor.u32 %v265, 2147483648
    %v268 = vmul.f32 %v267, 1.442695
    %v269 = vpow.pop %v268
    %v270 = vadd.f32 %v269, 1.0
    %v271 = vrcp.pop %v270
    %v272 = vmul.f32 1.0, %v271
    %v273 = vsel %vm108, %v266, %v272
    %275 = vrot.lane.b32.xlu0 %v110, 32
    %v276 = vpop.permute.xlu0 %275
    %v278 = vmul.f32 %v273, %v276
    %280 = vrot.lane.b32.xlu0 %v273, 64
    %v281 = vpop.permute.xlu0 %280
    %v283 = vmul.f32 %v273, %v281
    %285 = vrot.lane.b32.xlu0 %v283, 32
    %v286 = vpop.permute.xlu0 %285
    %v288 = vadd.f32 %v278, %v286
    %v289 = vtanh.pop %v288
    %291 = vrot.lane.b32.xlu0 %v289, 64
    %v292 = vpop.permute.xlu0 %291
    %v294 = vmul.f32 %v273, %v292
    %296 = vrot.lane.b32.xlu0 %v294, 32
    %v297 = vpop.permute.xlu0 %296
    %299 = vst.msk [vmem:[#allocation2] sm:$0xff] %vm112, %v297
    %301 = vrot.lane.b32.xlu0 %v288, 96
    %v302 = vpop.permute.xlu0 %301
    %304 = vst.msk [vmem:[#allocation3] sm:$0xff] %vm112, %v302
    // Predicated region
    $region50: #{tpu_custom_call.1} parent=1 // pred_check
      %p305 = pneg %p86
    $region51: #{tpu_custom_call.1} parent=1 // pred_check_branch
      %307 = sbr.rel (%p305) target = $region53
    $region52: #{tpu_custom_call.1} parent=1 // pred_region
      %308 = vst.msk [vmem:[#allocation13] sm:$0xff] %vm112, %v297
      %s309 = scalar_lea.vmem [#allocation13], 8
      %310 = vst.msk [vmem:[%s309] sm:$0xff] %vm112, %v302
    $region53: #{tpu_custom_call.1} parent=1 // pred_fallthru
      _
    // Predicated region
    $region54: #{tpu_custom_call.1} parent=1 // pred_check
      _
    $region55: #{tpu_custom_call.1} parent=1 // pred_check_branch
      %312 = sbr.rel (0) target = $region57
    $region56: #{tpu_custom_call.1} parent=1 // pred_region
      %s314 = ssub.s32 256, 256
      %315 = vsyncadd [#allocation6], %s314
      %s316 = sshll.u32 [#allocation13], 4
      %s317 = int_to_ptr.vmem [resolvable:$true] %s316
      %322 = dma.vmem_to_hbm [thread:$0]  %s317, 256, %s6, [#allocation6], 128, 128, 8
    $region57: #{tpu_custom_call.1} parent=1 // pred_fallthru
      _
    // Predicated region
    $region58: #{tpu_custom_call.1} parent=1 // pred_check
      _
    $region59: #{tpu_custom_call.1} parent=1 // pred_check_branch
      %324 = sbr.rel (0) target = $region61
    $region60: #{tpu_custom_call.1} parent=1 // pred_region
      %325 = dma.done [#allocation6], 256
    $region61: #{tpu_custom_call.1} parent=1 // pred_fallthru
      _
    %326 = vsyncpa [#allocation5], 1
    %327 = vsyncpa [#allocation8], 1
    %328 = vsyncpa [#allocation11], 1
    %329 = vsyncpa [#allocation6], 1

</llo_original>
